<compile_context>
chip_gen: v5e
topology: v5e:2x2
jax: 0.10.0
libtpu: 0.0.40
codegen_flags: <defaults>
</compile_context>

<pallas_src>
import jax
import jax.numpy as jnp
from jax.experimental import pallas as pl
from jax.experimental.pallas import tpu as pltpu


def skipgram_kernel(center_ref, target_ref, embT_ref, out_ref, m_ref, l_ref):
    """Grid = (B_tiles, V_tiles); V is the innermost (reduction) axis.

    center_ref : [TB, D]   center embeddings for this batch tile
    target_ref : [TB, D]   target embeddings for this batch tile
    embT_ref   : [D, TV]   pre-transposed context-embedding tile (lane = V)
    out_ref    : [TB, 1]   per-row log-probability (written at last V step)
    m_ref,l_ref: [TB, 1]   running max / running exp-sum (online logsumexp)
    """
    v = pl.program_id(1)

    @pl.when(v == 0)
    def _():
        m_ref[...] = jnp.full_like(m_ref, -jnp.inf)
        l_ref[...] = jnp.zeros_like(l_ref)

    center = center_ref[...]                                        # [TB, D]

    # norm_scores tile: one dense MXU matmul, V on the lane axis.
    s = jnp.dot(center, embT_ref[...],
                preferred_element_type=jnp.float32)                 # [TB, TV]

    # Online (numerically stable) logsumexp accumulation over V tiles.
    m_prev = m_ref[...]                                             # [TB, 1]
    m_new = jnp.maximum(m_prev, jnp.max(s, axis=-1, keepdims=True)) # [TB, 1]
    l_ref[...] = (l_ref[...] * jnp.exp(m_prev - m_new)
                  + jnp.sum(jnp.exp(s - m_new), axis=-1, keepdims=True))
    m_ref[...] = m_new

    @pl.when(v == pl.num_programs(1) - 1)
    def _():
        # scores[b] = target[b] . center[b]  (zero-padded D doesn't change it)
        scores = jnp.sum(target_ref[...] * center, axis=-1, keepdims=True)
        # log(exp(scores) / sum_v exp(norm_scores)) == scores - logsumexp
        out_ref[...] = scores - (m_ref[...] + jnp.log(l_ref[...]))


def _pad_axis(x, axis, multiple):
    pad = (-x.shape[axis]) % multiple
    if pad == 0:
        return x
    widths = [(0, 0)] * x.ndim
    widths[axis] = (0, pad)
    return jnp.pad(x, widths)


def skipgram_forward(emb_v, emb_u, center_words, target_words, all_vocabs):
    """Plain-JAX gathers + Pallas kernel for the softmax-NLL hot path."""
    B = center_words.shape[0]

    # nn.Embedding lookups (gathers) — glue, kept in plain JAX.
    center = jnp.take(emb_v, center_words.reshape(-1), axis=0)      # [B, D]
    target = jnp.take(emb_u, target_words.reshape(-1), axis=0)      # [B, D]

    # all_vocabs carries the same index list for every batch row (the full
    # vocab in the Skipgram training loop), so gather the context table ONCE
    # and pre-transpose to [D, V] instead of materializing [B, V, D].
    # TODO(synk): a per-row-varying all_vocabs would need the per-batch gather path.
    vocab_ids = all_vocabs[0]
    V = int(vocab_ids.shape[0])
    emb_u_t = jnp.take(emb_u, vocab_ids, axis=0).T                  # [D, V]

    # Layout padding: D (lane for the LHS / sublane for the RHS) to 128 with
    # zeros (doesn't change any dot product), B to a multiple of 8.
    center = _pad_axis(center, 1, 128)
    target = _pad_axis(target, 1, 128)
    emb_u_t = _pad_axis(emb_u_t, 0, 128)
    D_pad = center.shape[1]

    center = _pad_axis(center, 0, 8)
    target = _pad_axis(target, 0, 8)
    B_pad = center.shape[0]

    # Tile sizes: B tile sublane-aligned, V tile lane-aligned (fallback: full V).
    tb = next(c for c in (512, 256, 128, 64, 32, 16, 8) if B_pad % c == 0)
    tv = next((c for c in (4096, 2048, 1024, 512, 256, 128) if V % c == 0), V)
    grid = (B_pad // tb, pl.cdiv(V, tv))

    log_prob = pl.pallas_call(
        skipgram_kernel,
        out_shape=jax.ShapeDtypeStruct((B_pad, 1), jnp.float32),
        grid_spec=pltpu.PrefetchScalarGridSpec(
            num_scalar_prefetch=0,
            grid=grid,
            in_specs=[
                pl.BlockSpec((tb, D_pad), lambda b, v: (b, 0)),     # center
                pl.BlockSpec((tb, D_pad), lambda b, v: (b, 0)),     # target
                pl.BlockSpec((D_pad, tv), lambda b, v: (0, v)),     # emb_u^T
            ],
            out_specs=pl.BlockSpec((tb, 1), lambda b, v: (b, 0)),
            scratch_shapes=[
                pltpu.VMEM((tb, 1), jnp.float32),   # running max
                pltpu.VMEM((tb, 1), jnp.float32),   # running exp-sum
            ],
        ),
        compiler_params=pltpu.CompilerParams(
            dimension_semantics=("parallel", "arbitrary")),
    )(center, target, emb_u_t)

    return -jnp.mean(log_prob[:B, 0])


def skipgram_reference(emb_v, emb_u, center_words, target_words, all_vocabs):
    """Pure-JAX reference mirroring the PyTorch module exactly."""
    hp = jax.lax.Precision.HIGHEST
    center = jnp.take(emb_v, center_words, axis=0)                  # [B, 1, D]
    target = jnp.take(emb_u, target_words, axis=0)                  # [B, 1, D]
    all_e = jnp.take(emb_u, all_vocabs, axis=0)                     # [B, V, D]
    scores = jnp.einsum("bqd,bkd->bqk", target, center, precision=hp)[..., 0]
    norm_scores = jnp.einsum("bvd,bkd->bvk", all_e, center, precision=hp)[..., 0]
    return -jnp.mean(
        jnp.log(jnp.exp(scores)
                / jnp.sum(jnp.exp(norm_scores), axis=1, keepdims=True)))


if __name__ == "__main__":
    vocab_size = 384   # -> 3 V-tiles of 128 (exercises the online accumulator)
    emb_size = 96      # -> D padded 96 -> 128 (exercises the padding path)
    batch = 24         # -> 3 B-tiles of 8

    key = jax.random.PRNGKey(0)
    k_v, k_u, k_c, k_t = jax.random.split(key, 4)

    emb_v = 0.5 * jax.random.normal(k_v, (vocab_size, emb_size), dtype=jnp.float32)
    emb_u = 0.5 * jax.random.normal(k_u, (vocab_size, emb_size), dtype=jnp.float32)

    center_words = jax.random.randint(k_c, (batch, 1), 0, vocab_size, dtype=jnp.int32)
    target_words = jax.random.randint(k_t, (batch, 1), 0, vocab_size, dtype=jnp.int32)
    all_vocabs = jnp.tile(jnp.arange(vocab_size, dtype=jnp.int32)[None, :], (batch, 1))

    nll = skipgram_forward(emb_v, emb_u, center_words, target_words, all_vocabs)
    jax.block_until_ready(nll)

    ref = skipgram_reference(emb_v, emb_u, center_words, target_words, all_vocabs)
    assert jnp.allclose(nll, ref, rtol=1e-4, atol=1e-4), (nll, ref)

    print("KERNEL_OK")
</pallas_src>

<mosaic_0001>
module attributes {stable_mosaic.version = 11 : i64} {
  func.func @skipgram_kernel(%arg0: i32, %arg1: i32, %arg2: memref<8x128xf32, #tpu.memory_space<vmem>>, %arg3: memref<8x128xf32, #tpu.memory_space<vmem>>, %arg4: memref<128x128xf32, #tpu.memory_space<vmem>>, %arg5: memref<8x1xf32, #tpu.memory_space<vmem>>, %arg6: memref<8x1xf32, #tpu.memory_space<vmem>>, %arg7: memref<8x1xf32, #tpu.memory_space<vmem>>) attributes {dimension_semantics = [#tpu.dimension_semantics<parallel>, #tpu.dimension_semantics<arbitrary>], iteration_bounds = array<i64: 3, 3>, scalar_prefetch = 0 : i64, scratch_operands = 2 : i64, tpu.core_type = #tpu.core_type<tc>, window_params = [{transform_indices = @transform_0, window_bounds = array<i64: 8, 128>}, {transform_indices = @transform_1, window_bounds = array<i64: 8, 128>}, {transform_indices = @transform_2, window_bounds = array<i64: 128, 128>}, {transform_indices = @transform_3, window_bounds = array<i64: 8, 1>}]} {
    %c0_i32 = arith.constant 0 : i32
    %0 = arith.cmpi eq, %arg1, %c0_i32 : i32
    %1 = arith.extui %0 : i1 to i32
    %c0_i32_0 = arith.constant 0 : i32
    %2 = arith.cmpi ne, %1, %c0_i32_0 : i32
    scf.if %2 {
      %cst_15 = arith.constant 0xFF800000 : f32
      %25 = vector.broadcast %cst_15 : f32 to vector<8x1xf32>
      %c0_16 = arith.constant 0 : index
      %c0_17 = arith.constant 0 : index
      %26 = vector.load %arg6[%c0_16, %c0_17] : memref<8x1xf32, #tpu.memory_space<vmem>>, vector<8x1xf32>
      tpu.vector_store %arg6[%c0_16, %c0_17], %25 {strides = array<i32>} : memref<8x1xf32, #tpu.memory_space<vmem>>, vector<8x1xf32>,
      %cst_18 = arith.constant 0.000000e+00 : f32
      %27 = vector.broadcast %cst_18 : f32 to vector<8x1xf32>
      %c0_19 = arith.constant 0 : index
      %c0_20 = arith.constant 0 : index
      %28 = vector.load %arg7[%c0_19, %c0_20] : memref<8x1xf32, #tpu.memory_space<vmem>>, vector<8x1xf32>
      tpu.vector_store %arg7[%c0_19, %c0_20], %27 {strides = array<i32>} : memref<8x1xf32, #tpu.memory_space<vmem>>, vector<8x1xf32>,
    } else {
    }
    %c0 = arith.constant 0 : index
    %c0_1 = arith.constant 0 : index
    %3 = vector.load %arg2[%c0, %c0_1] : memref<8x128xf32, #tpu.memory_space<vmem>>, vector<8x128xf32>
    %c0_2 = arith.constant 0 : index
    %c0_3 = arith.constant 0 : index
    %4 = vector.load %arg4[%c0_2, %c0_3] : memref<128x128xf32, #tpu.memory_space<vmem>>, vector<128x128xf32>
    %cst = arith.constant dense<0.000000e+00> : vector<8x128xf32>
    %5 = tpu.matmul %3, %4, %cst {dimension_numbers = #tpu.dot_dimension_numbers<[1], [0], [0], [1], [0, 0, 1, 1], [], []>} : vector<8x128xf32>, vector<128x128xf32>, vector<8x128xf32> -> vector<8x128xf32>
    %c0_4 = arith.constant 0 : index
    %c0_5 = arith.constant 0 : index
    %6 = vector.load %arg6[%c0_4, %c0_5] : memref<8x1xf32, #tpu.memory_space<vmem>>, vector<8x1xf32>
    %cst_6 = arith.constant dense<0xFF800000> : vector<8xf32>
    %7 = vector.multi_reduction <maximumf>, %5, %cst_6 [1] : vector<8x128xf32> to vector<8xf32>
    %8 = vector.shape_cast %7 : vector<8xf32> to vector<8x1xf32>
    %9 = arith.maximumf %6, %8 : vector<8x1xf32>
    %c0_7 = arith.constant 0 : index
    %c0_8 = arith.constant 0 : index
    %10 = vector.load %arg7[%c0_7, %c0_8] : memref<8x1xf32, #tpu.memory_space<vmem>>, vector<8x1xf32>
    %11 = arith.subf %6, %9 : vector<8x1xf32>
    %12 = math.exp %11 : vector<8x1xf32>
    %13 = arith.mulf %10, %12 : vector<8x1xf32>
    %14 = vector.broadcast %9 : vector<8x1xf32> to vector<8x128xf32>
    %15 = arith.subf %5, %14 : vector<8x128xf32>
    %16 = math.exp %15 : vector<8x128xf32>
    %cst_9 = arith.constant dense<0.000000e+00> : vector<8xf32>
    %17 = vector.multi_reduction <add>, %16, %cst_9 [1] : vector<8x128xf32> to vector<8xf32>
    %18 = vector.shape_cast %17 : vector<8xf32> to vector<8x1xf32>
    %19 = arith.addf %13, %18 : vector<8x1xf32>
    %c0_10 = arith.constant 0 : index
    %c0_11 = arith.constant 0 : index
    %20 = vector.load %arg7[%c0_10, %c0_11] : memref<8x1xf32, #tpu.memory_space<vmem>>, vector<8x1xf32>
    tpu.vector_store %arg7[%c0_10, %c0_11], %19 {strides = array<i32>} : memref<8x1xf32, #tpu.memory_space<vmem>>, vector<8x1xf32>,
    %c0_12 = arith.constant 0 : index
    %c0_13 = arith.constant 0 : index
    %21 = vector.load %arg6[%c0_12, %c0_13] : memref<8x1xf32, #tpu.memory_space<vmem>>, vector<8x1xf32>
    tpu.vector_store %arg6[%c0_12, %c0_13], %9 {strides = array<i32>} : memref<8x1xf32, #tpu.memory_space<vmem>>, vector<8x1xf32>,
    %c2_i32 = arith.constant 2 : i32
    %22 = arith.cmpi eq, %arg1, %c2_i32 : i32
    %23 = arith.extui %22 : i1 to i32
    %c0_i32_14 = arith.constant 0 : i32
    %24 = arith.cmpi ne, %23, %c0_i32_14 : i32
    scf.if %24 {
      %c0_15 = arith.constant 0 : index
      %c0_16 = arith.constant 0 : index
      %25 = vector.load %arg3[%c0_15, %c0_16] : memref<8x128xf32, #tpu.memory_space<vmem>>, vector<8x128xf32>
      %26 = arith.mulf %25, %3 : vector<8x128xf32>
      %cst_17 = arith.constant dense<0.000000e+00> : vector<8xf32>
      %27 = vector.multi_reduction <add>, %26, %cst_17 [1] : vector<8x128xf32> to vector<8xf32>
      %28 = vector.shape_cast %27 : vector<8xf32> to vector<8x1xf32>
      %c0_18 = arith.constant 0 : index
      %c0_19 = arith.constant 0 : index
      %29 = vector.load %arg6[%c0_18, %c0_19] : memref<8x1xf32, #tpu.memory_space<vmem>>, vector<8x1xf32>
      %c0_20 = arith.constant 0 : index
      %c0_21 = arith.constant 0 : index
      %30 = vector.load %arg7[%c0_20, %c0_21] : memref<8x1xf32, #tpu.memory_space<vmem>>, vector<8x1xf32>
      %31 = math.log %30 : vector<8x1xf32>
      %32 = arith.addf %29, %31 : vector<8x1xf32>
      %33 = arith.subf %28, %32 : vector<8x1xf32>
      %c0_22 = arith.constant 0 : index
      %c0_23 = arith.constant 0 : index
      %34 = vector.load %arg5[%c0_22, %c0_23] : memref<8x1xf32, #tpu.memory_space<vmem>>, vector<8x1xf32>
      tpu.vector_store %arg5[%c0_22, %c0_23], %33 {strides = array<i32>} : memref<8x1xf32, #tpu.memory_space<vmem>>, vector<8x1xf32>,
    } else {
    }
    return
  }
  func.func @transform_0(%arg0: i32, %arg1: i32) -> (i32, i32) {
    %c0_i32 = arith.constant 0 : i32
    %c0_i32_0 = arith.constant 0 : i32
    return %arg0, %c0_i32 : i32, i32
  }
  func.func @transform_1(%arg0: i32, %arg1: i32) -> (i32, i32) {
    %c0_i32 = arith.constant 0 : i32
    %c0_i32_0 = arith.constant 0 : i32
    return %arg0, %c0_i32 : i32, i32
  }
  func.func @transform_2(%arg0: i32, %arg1: i32) -> (i32, i32) {
    %c0_i32 = arith.constant 0 : i32
    %c0_i32_0 = arith.constant 0 : i32
    return %c0_i32, %arg1 : i32, i32
  }
  func.func @transform_3(%arg0: i32, %arg1: i32) -> (i32, i32) {
    %c0_i32 = arith.constant 0 : i32
    %c0_i32_0 = arith.constant 0 : i32
    return %arg0, %c0_i32 : i32, i32
  }
}

</mosaic_0001>

<llo_original>
// kernel: tpu_custom_call.1
$region0: #{tpu_custom_call.1}
  #allocation0 [shape = 'u32[]', space=smem, size = 0x4, offset = 0x4, fixed_abs, tag = 'smem constant byte address 0x4 - core index']
  #allocation1 [shape = 'u32[72,128]{1,0:T(1,128)}', space=vmem, size = 0x9000, scoped, tag = 'internal scratch']
  #allocation2 [shape = 'f32[8,1]{1,0:T(8,128)}', space=vmem, size = 0x1000, scoped, tag = 'scratch operand']
  #allocation3 [shape = 'f32[8,1]{1,0:T(8,128)}', space=vmem, size = 0x1000, scoped, tag = 'scratch operand']
  %s0 = inlined_call_operand.hbm [shape: f32[24,128], index: 0, kind: input, shape index: {}]
  %s1 = inlined_call_operand.hbm [shape: f32[24,128], index: 1, kind: input, shape index: {}]
  %s2 = inlined_call_operand.hbm [shape: f32[128,384], index: 2, kind: input, shape index: {}]
  %s3 = inlined_call_operand.vmem [shape: f32[24,1], index: 3, kind: output, shape index: {}]
  %s4 = sld [smem:[#allocation0]]
  $region65: #{tpu_custom_call.1} parent=0
    _
  %s6 = ssub.s32 1, %s4
  %s7 = scalar_select 0, %s6, %s4
  $region1: #{tpu_custom_call.1} parent=0
    #allocation4 [shape = 'u8[8192]{0}', space=vmem, size = 0x2000, scoped, tag = 'input window, operand 0']
    #allocation5 [shape = 's32[2]{0}', space=sflag, size = 0x8, scoped, tag = 'scoped memory for tpu_custom_call.1']
    #allocation6 [shape = 'u8[8192]{0}', space=vmem, size = 0x2000, scoped, tag = 'input window, operand 1']
    #allocation7 [shape = 's32[2]{0}', space=sflag, size = 0x8, scoped, tag = 'scoped memory for tpu_custom_call.1']
    #allocation8 [shape = 'u8[131072]{0}', space=vmem, size = 0x20000, scoped, tag = 'input window, operand 2']
    %8 = vsyncpa [#allocation5], 0
    %s9 = scalar_lea.sflag [#allocation5], 1
    %10 = vsyncpa %s9, 0
    %11 = vsyncpa [#allocation7], 0
    %s12 = scalar_lea.sflag [#allocation7], 1
    %13 = vsyncpa %s12, 0
    loop: start=0, step=1, limit=11
    $region2: #{tpu_custom_call.1} parent=1 // loop_pre_header
      _
    $region3: #{tpu_custom_call.1} parent=1 // loop_header
      %s15 = sphi 0, %s19
      %p16 = scmp.ge.s32.totalorder %s15, 11
      %s22 = sphi 0, %s34
      %s23 = sphi 0, %s30
      %s24 = sphi 0, %s22
      %s25 = sphi 0, %s23
      %s26 = sphi 0, %s24
      %s27 = sphi 0, %s25
      %s37 = sphi 0, %s39
      %s40 = sphi 0, %s37
      %s41 = sphi 0, %s40
      %s57 = sphi 0, %s41
      %s63 = sphi 0, %s65
      %s66 = sphi 0, %s63
      %s67 = sphi 0, %s66
      %s83 = sphi 0, %s67
      %s89 = sphi 0, %s91
      %s92 = sphi 0, %s89
      %s93 = sphi 0, %s92
      %s109 = sphi 0, %s93
      %s115 = sphi 0, %s117
      %s118 = sphi 0, %s115
      %s119 = sphi 0, %s118
      %s135 = sphi 0, %s119
    $region4: #{tpu_custom_call.1} parent=1 // loop_header_branch
      %18 = sbr.rel (%p16) target = $region8
    $region5: #{tpu_custom_call.1} parent=1 // loop_body
      %s20 = ssub.s32 %s15, 1
      %s21 = ssub.s32 %s15, 2
      %s28 = sadd.s32 1, %s23
      %p29 = scmp.ge.s32.totalorder %s28, 3
      %s30 = scalar_select %p29, 0, %s28
      %s31 = sadd.s32 1, %s22
      %s32 = scalar_select %p29, %s31, %s22
      %p33 = scmp.ge.s32.totalorder %s32, 3
      %s34 = scalar_select %p33, 0, %s32
      %s35 = ssub.s32 %s22, %s34
      %p36 = scmp.eq.s32.totalorder %s35, 0
      %s38 = sadd.s32 %s37, 1
      %s39 = scalar_select %p36, %s37, %s38
      %p42 = pneg %p36
      %p43 = scmp.eq.s32.totalorder %s15, 8
      %p44 = por %p42, %p43
      %p45 = scmp.ne.s32.totalorder %s37, %s40
      %p46 = scmp.eq.s32.totalorder %s15, 0
      %p47 = por %p45, %p46
      %p48 = scmp.ne.s32.totalorder %s37, %s40
      %p49 = scmp.eq.s32.totalorder %s20, 8
      %p50 = por %p48, %p49
      %p51 = scmp.ne.s32.totalorder %s40, %s41
      %p52 = scmp.eq.s32.totalorder %s20, 0
      %p53 = por %p51, %p52
      %p54 = scmp.ne.s32.totalorder %s40, %s41
      %p55 = scmp.eq.s32.totalorder %s21, 8
      %p56 = por %p54, %p55
      %p58 = scmp.ne.s32.totalorder %s41, %s57
      %p59 = scmp.eq.s32.totalorder %s21, 0
      %p60 = por %p58, %p59
      %s61 = ssub.s32 %s22, %s34
      %p62 = scmp.eq.s32.totalorder %s61, 0
      %s64 = sadd.s32 %s63, 1
      %s65 = scalar_select %p62, %s63, %s64
      %p68 = pneg %p62
      %p69 = scmp.eq.s32.totalorder %s15, 8
      %p70 = por %p68, %p69
      %p71 = scmp.ne.s32.totalorder %s63, %s66
      %p72 = scmp.eq.s32.totalorder %s15, 0
      %p73 = por %p71, %p72
      %p74 = scmp.ne.s32.totalorder %s63, %s66
      %p75 = scmp.eq.s32.totalorder %s20, 8
      %p76 = por %p74, %p75
      %p77 = scmp.ne.s32.totalorder %s66, %s67
      %p78 = scmp.eq.s32.totalorder %s20, 0
      %p79 = por %p77, %p78
      %p80 = scmp.ne.s32.totalorder %s66, %s67
      %p81 = scmp.eq.s32.totalorder %s21, 8
      %p82 = por %p80, %p81
      %p84 = scmp.ne.s32.totalorder %s67, %s83
      %p85 = scmp.eq.s32.totalorder %s21, 0
      %p86 = por %p84, %p85
      %s87 = ssub.s32 %s23, %s30
      %p88 = scmp.eq.s32.totalorder %s87, 0
      %s90 = sadd.s32 %s89, 1
      %s91 = scalar_select %p88, %s89, %s90
      %p94 = pneg %p88
      %p95 = scmp.eq.s32.totalorder %s15, 8
      %p96 = por %p94, %p95
      %p97 = scmp.ne.s32.totalorder %s89, %s92
      %p98 = scmp.eq.s32.totalorder %s15, 0
      %p99 = por %p97, %p98
      %p100 = scmp.ne.s32.totalorder %s89, %s92
      %p101 = scmp.eq.s32.totalorder %s20, 8
      %p102 = por %p100, %p101
      %p103 = scmp.ne.s32.totalorder %s92, %s93
      %p104 = scmp.eq.s32.totalorder %s20, 0
      %p105 = por %p103, %p104
      %p106 = scmp.ne.s32.totalorder %s92, %s93
      %p107 = scmp.eq.s32.totalorder %s21, 8
      %p108 = por %p106, %p107
      %p110 = scmp.ne.s32.totalorder %s93, %s109
      %p111 = scmp.eq.s32.totalorder %s21, 0
      %p112 = por %p110, %p111
      %s113 = ssub.s32 %s22, %s34
      %p114 = scmp.eq.s32.totalorder %s113, 0
      %s116 = sadd.s32 %s115, 1
      %s117 = scalar_select %p114, %s115, %s116
      %p120 = pneg %p114
      %p121 = scmp.eq.s32.totalorder %s15, 8
      %p122 = por %p120, %p121
      %p123 = scmp.ne.s32.totalorder %s115, %s118
      %p124 = scmp.eq.s32.totalorder %s15, 0
      %p125 = por %p123, %p124
      %p126 = scmp.ne.s32.totalorder %s115, %s118
      %p127 = scmp.eq.s32.totalorder %s20, 8
      %p128 = por %p126, %p127
      %p129 = scmp.ne.s32.totalorder %s118, %s119
      %p130 = scmp.eq.s32.totalorder %s20, 0
      %p131 = por %p129, %p130
      %p132 = scmp.ne.s32.totalorder %s118, %s119
      %p133 = scmp.eq.s32.totalorder %s21, 8
      %p134 = por %p132, %p133
      %p136 = scmp.ne.s32.totalorder %s119, %s135
      %p137 = scmp.eq.s32.totalorder %s21, 0
      %p138 = por %p136, %p137
      %p139 = scmp.le.s32.totalorder 1, %s15
      %p140 = scmp.lt.s32.totalorder %s15, 10
      %p141 = pnand %p139, %p140
      %p142 = pneg %p141
      // Predicated region
      $region9: #{tpu_custom_call.1} parent=5 // pred_check
        _
      $region10: #{tpu_custom_call.1} parent=5 // pred_check_branch
        %144 = sbr.rel (%p141) target = $region12
      $region11: #{tpu_custom_call.1} parent=5 // pred_region
        %s145 = ssub.s32 %s15, 1
      $region12: #{tpu_custom_call.1} parent=5 // pred_fallthru
        _
      %p146 = scmp.lt.s32.totalorder %s15, 9
      // Predicated region
      $region13: #{tpu_custom_call.1} parent=5 // pred_check
        %p147 = pneg %p146
      $region14: #{tpu_custom_call.1} parent=5 // pred_check_branch
        %149 = sbr.rel (%p147) target = $region16
      $region15: #{tpu_custom_call.1} parent=5 // pred_region
        // Predicated region
        $region17: #{tpu_custom_call.1} parent=15 // pred_check
          %p150 = pneg %p47
        $region18: #{tpu_custom_call.1} parent=15 // pred_check_branch
          %152 = sbr.rel (%p150) target = $region20
        $region19: #{tpu_custom_call.1} parent=15 // pred_region
          %s153 = sand.u32 %s37, 1
          %s154 = scalar_lea.sflag [#allocation5], %s153
          %s155 = sand.u32 %s37, 1
          %s156 = smul.addr %s155, 8
          %s157 = scalar_lea.vmem [#allocation4], %s156
          %159 = vsyncadd %s154, 0
          %s160 = smul.addr %s22, 8
          %s161 = scalar_lea.hbm %s0, %s160
          %s163 = sshll.u32 %s161, 4
          %s164 = int_to_ptr.hbm [resolvable:$true] %s163
          %s165 = sshll.u32 %s157, 4
          %s166 = int_to_ptr.vmem [resolvable:$true] %s165
          %168 = dma.hbm_to_vmem [thread:$0]  %s164, 128, %s166, %s154
        $region20: #{tpu_custom_call.1} parent=15 // pred_fallthru
          _
        // Predicated region
        $region21: #{tpu_custom_call.1} parent=15 // pred_check
          %p169 = pneg %p73
        $region22: #{tpu_custom_call.1} parent=15 // pred_check_branch
          %171 = sbr.rel (%p169) target = $region24
        $region23: #{tpu_custom_call.1} parent=15 // pred_region
          %s172 = sand.u32 %s15, 1
          %s173 = scalar_lea.sflag [#allocation7], %s172
          %s174 = sand.u32 %s63, 1
          %s175 = smul.addr %s174, 8
          %s176 = scalar_lea.vmem [#allocation6], %s175
          %178 = vsyncadd %s173, 0
          %s179 = smul.addr %s22, 8
          %s180 = scalar_lea.hbm %s1, %s179
          %s182 = sshll.u32 %s180, 4
          %s183 = int_to_ptr.hbm [resolvable:$true] %s182
          %s184 = sshll.u32 %s176, 4
          %s185 = int_to_ptr.vmem [resolvable:$true] %s184
          %187 = dma.hbm_to_vmem [thread:$0]  %s183, 128, %s185, %s173
        $region24: #{tpu_custom_call.1} parent=15 // pred_fallthru
          _
        // Predicated region
        $region25: #{tpu_custom_call.1} parent=15 // pred_check
          %p188 = pneg %p99
        $region26: #{tpu_custom_call.1} parent=15 // pred_check_branch
          %190 = sbr.rel (%p188) target = $region28
        $region27: #{tpu_custom_call.1} parent=15 // pred_region
          %s191 = sand.u32 %s15, 1
          %s192 = scalar_lea.sflag [#allocation7], %s191
          %s193 = sand.u32 %s89, 1
          %s194 = smul.addr %s193, 128
          %s195 = scalar_lea.vmem [#allocation8], %s194
          %197 = vsyncadd %s192, 0
          %s198 = smul.addr %s23, 8
          %s199 = scalar_lea.hbm %s2, %s198
          %s200 = sshll.u32 %s199, 4
          %s201 = int_to_ptr.hbm [resolvable:$true] %s200
          %s202 = sshll.u32 %s195, 4
          %s203 = int_to_ptr.vmem [resolvable:$true] %s202
          %208 = dma.hbm_to_vmem [thread:$0]  %s201, 2048, %s203, %s192, 384, 128, 8
        $region28: #{tpu_custom_call.1} parent=15 // pred_fallthru
          _
      $region16: #{tpu_custom_call.1} parent=5 // pred_fallthru
        _
      %p209 = scmp.le.s32.totalorder 1, %s15
      %p210 = scmp.lt.s32.totalorder %s15, 10
      %p211 = pnand %p209, %p210
      %p212 = pneg %p211
      // Predicated region
      $region29: #{tpu_custom_call.1} parent=5 // pred_check
        _
      $region30: #{tpu_custom_call.1} parent=5 // pred_check_branch
        %214 = sbr.rel (%p211) target = $region32
      $region31: #{tpu_custom_call.1} parent=5 // pred_region
        %s215 = ssub.s32 %s15, 1
        %s216 = sand.u32 %s40, 1
        %s217 = scalar_lea.sflag [#allocation5], %s216
        %s218 = sand.u32 %s40, 1
        %s219 = smul.addr %s218, 8
        %s220 = scalar_lea.vmem [#allocation4], %s219
        // Predicated region
        $region33: #{tpu_custom_call.1} parent=31 // pred_check
          %p221 = pneg %p53
        $region34: #{tpu_custom_call.1} parent=31 // pred_check_branch
          %223 = sbr.rel (%p221) target = $region36
        $region35: #{tpu_custom_call.1} parent=31 // pred_region
          %225 = dma.done %s217, 128
        $region36: #{tpu_custom_call.1} parent=31 // pred_fallthru
          _
        %s226 = sand.u32 %s20, 1
        %s227 = scalar_lea.sflag [#allocation7], %s226
        %s228 = sand.u32 %s66, 1
        %s229 = smul.addr %s228, 8
        %s230 = scalar_lea.vmem [#allocation6], %s229
        // Predicated region
        $region37: #{tpu_custom_call.1} parent=31 // pred_check
          %p231 = pneg %p79
        $region38: #{tpu_custom_call.1} parent=31 // pred_check_branch
          %233 = sbr.rel (%p231) target = $region40
        $region39: #{tpu_custom_call.1} parent=31 // pred_region
          %235 = dma.done %s227, 128
        $region40: #{tpu_custom_call.1} parent=31 // pred_fallthru
          _
        %s236 = sand.u32 %s20, 1
        %s237 = scalar_lea.sflag [#allocation7], %s236
        %s238 = sand.u32 %s92, 1
        %s239 = smul.addr %s238, 128
        %s240 = scalar_lea.vmem [#allocation8], %s239
        // Predicated region
        $region41: #{tpu_custom_call.1} parent=31 // pred_check
          %p241 = pneg %p105
        $region42: #{tpu_custom_call.1} parent=31 // pred_check_branch
          %243 = sbr.rel (%p241) target = $region44
        $region43: #{tpu_custom_call.1} parent=31 // pred_region
          %245 = dma.done %s237, 2048
        $region44: #{tpu_custom_call.1} parent=31 // pred_fallthru
          _
        %s246 = sand.u32 %s40, 1
        %s247 = scalar_lea.sflag [#allocation5], %s246
        %s248 = sand.u32 %s40, 1
        %s249 = smul.addr %s248, 8
        %s250 = scalar_lea.vmem [#allocation4], %s249
        %p251 = pneg %p53
        %p252 = pneg %p50
        %s253 = sand.u32 %s20, 1
        %s254 = scalar_lea.sflag [#allocation7], %s253
        %s255 = sand.u32 %s66, 1
        %s256 = smul.addr %s255, 8
        %s257 = scalar_lea.vmem [#allocation6], %s256
        %p258 = pneg %p79
        %p259 = pneg %p76
        %s260 = sand.u32 %s20, 1
        %s261 = scalar_lea.sflag [#allocation7], %s260
        %s262 = sand.u32 %s92, 1
        %s263 = smul.addr %s262, 128
        %s264 = scalar_lea.vmem [#allocation8], %s263
        %p265 = pneg %p105
        %p266 = pneg %p102
        %p267 = pneg %p131
        %p268 = pneg %p128
        %p269 = scmp.lt.s32.totalorder %s24, 2
        %s270 = scalar_select %p269, %s24, 2
        %s271 = smul.addr %s270, 8
        %s272 = scalar_lea.vmem %s3, %s271
        %p273 = scmp.lt.s32.totalorder %s24, 2
        %s274 = scalar_select %p273, %s24, 2
        %s275 = smul.addr %s274, 8
        %s276 = scalar_lea.vmem %s3, %s275
        %p277 = scmp.eq.s32.totalorder %s25, 0
        // Predicated region
        $region45: #{tpu_custom_call.1} parent=31 // pred_check
          %p278 = pneg %p277
        $region46: #{tpu_custom_call.1} parent=31 // pred_check_branch
          %280 = sbr.rel (%p278) target = $region48
        $region47: #{tpu_custom_call.1} parent=31 // pred_region
          %vm281 = vcmask 7168
          %282 = vst.msk [vmem:[#allocation2] sm:$0xff] %vm281, -inf
          %283 = vst.msk [vmem:[#allocation3] sm:$0xff] %vm281, 0.0
        $region48: #{tpu_custom_call.1} parent=31 // pred_fallthru
          _
        %v284 = vld [vmem:[%s220] sm:$0xff]
        %v285 = vld [vmem:[%s240] sm:$0xff]
        %v286 = vld [vmem:[%s240 + $0x8] sm:$0xff]
        %v287 = vld [vmem:[%s240 + $0x10] sm:$0xff]
        %v288 = vld [vmem:[%s240 + $0x18] sm:$0xff]
        %v289 = vld [vmem:[%s240 + $0x20] sm:$0xff]
        %v290 = vld [vmem:[%s240 + $0x28] sm:$0xff]
        %v291 = vld [vmem:[%s240 + $0x30] sm:$0xff]
        %v292 = vld [vmem:[%s240 + $0x38] sm:$0xff]
        %v293 = vld [vmem:[%s240 + $0x40] sm:$0xff]
        %v294 = vld [vmem:[%s240 + $0x48] sm:$0xff]
        %v295 = vld [vmem:[%s240 + $0x50] sm:$0xff]
        %v296 = vld [vmem:[%s240 + $0x58] sm:$0xff]
        %v297 = vld [vmem:[%s240 + $0x60] sm:$0xff]
        %v298 = vld [vmem:[%s240 + $0x68] sm:$0xff]
        %v299 = vld [vmem:[%s240 + $0x70] sm:$0xff]
        %v300 = vld [vmem:[%s240 + $0x78] sm:$0xff]
        %301 = vmatpush.msra.mxu0 %v300
        %302 = vmatpush.msra.mxu0 %v299
        %303 = vmatpush.msra.mxu0 %v298
        %304 = vmatpush.msra.mxu0 %v297
        %305 = vmatpush.msra.mxu0 %v296
        %306 = vmatpush.msra.mxu0 %v295
        %307 = vmatpush.msra.mxu0 %v294
        %308 = vmatpush.msra.mxu0 %v293
        %309 = vmatpush.msra.mxu0 %v292
        %310 = vmatpush.msra.mxu0 %v291
        %311 = vmatpush.msra.mxu0 %v290
        %312 = vmatpush.msra.mxu0 %v289
        %313 = vmatpush.msra.mxu0 %v288
        %314 = vmatpush.msra.mxu0 %v287
        %315 = vmatpush.msra.mxu0 %v286
        %316 = vmatpush.msra.mxu0 %v285
        %317 = vmatmul.f32.gmra.mxu0 %v284
        %v318 = vpop.f32.mrf.mxu0
        %v319 = vadd.f32 0.0, %v318
        %320 = vdwg.mxu0
        %v321 = vld [vmem:[#allocation2] sm:$0xff]
        %322 = vmax.xlane.f32.xlu0 %v319
        %v323 = vpop.xlane.xlu0 %322
        %v324 = vmax.f32 %v321, %v323
        %v325 = vld [vmem:[#allocation3] sm:$0xff]
        %v326 = vsub.f32 %v321, %v324
        %v327 = vmul.f32 %v326, 1.442695
        %v328 = vpow.pop %v327
        %v329 = vmul.f32 %v325, %v328
        %331 = vset.pattern.permute.xlu0 0
        %332 = vperm.xlu0 %331, %v324
        %v333 = vpop.permute.xlu0 %332
        %v335 = vsub.f32 %v319, %v333
        %v336 = vmul.f32 %v335, 1.442695
        %v337 = vpow.pop %v336
        %338 = vadd.xlane.f32.xlu0 %v337
        %v339 = vpop.xlane.xlu0 %338
        %v340 = vadd.f32 %v329, %v339
        %vm341 = vcmask 7168
        %342 = vst.msk [vmem:[#allocation3] sm:$0xff] %vm341, %v340
        %343 = vst.msk [vmem:[#allocation2] sm:$0xff] %vm341, %v324
        %p344 = scmp.eq.s32.totalorder %s25, 2
        // Predicated region
        $region49: #{tpu_custom_call.1} parent=31 // pred_check
          %p345 = pneg %p344
        $region50: #{tpu_custom_call.1} parent=31 // pred_check_branch
          %347 = sbr.rel (%p345) target = $region52
        $region51: #{tpu_custom_call.1} parent=31 // pred_region
          %v348 = vld [vmem:[%s230] sm:$0xff]
          %v349 = vmul.f32 %v348, %v284
          %350 = vadd.xlane.f32.xlu0 %v349
          %v351 = vpop.xlane.xlu0 %350
          %v352 = vld [vmem:[#allocation2] sm:$0xff]
          %v353 = vld [vmem:[#allocation3] sm:$0xff]
          %v354 = vlog2.pop %v353
          %v355 = vmul.f32 %v354, 0.6931472
          %v356 = vadd.f32 %v352, %v355
          %v357 = vsub.f32 %v351, %v356
          %358 = vst.msk [vmem:[%s276] sm:$0xff] %vm341, %v357
        $region52: #{tpu_custom_call.1} parent=31 // pred_fallthru
          _
        %p359 = scmp.lt.s32.totalorder %s24, 2
        %s360 = scalar_select %p359, %s24, 2
        %s361 = smul.addr %s360, 8
        %s362 = scalar_lea.vmem %s3, %s361
        // Predicated region
        $region53: #{tpu_custom_call.1} parent=31 // pred_check
          %p363 = pneg %p128
        $region54: #{tpu_custom_call.1} parent=31 // pred_check_branch
          %365 = sbr.rel (%p363) target = $region56
        $region55: #{tpu_custom_call.1} parent=31 // pred_region
          _
        $region56: #{tpu_custom_call.1} parent=31 // pred_fallthru
          _
      $region32: #{tpu_custom_call.1} parent=5 // pred_fallthru
        _
      %p366 = scmp.le.s32.totalorder 2, %s15
      // Predicated region
      $region57: #{tpu_custom_call.1} parent=5 // pred_check
        %p367 = pneg %p366
      $region58: #{tpu_custom_call.1} parent=5 // pred_check_branch
        %369 = sbr.rel (%p367) target = $region60
      $region59: #{tpu_custom_call.1} parent=5 // pred_region
        %s370 = ssub.s32 %s15, 2
        // Predicated region
        $region61: #{tpu_custom_call.1} parent=59 // pred_check
          %p371 = pneg %p134
        $region62: #{tpu_custom_call.1} parent=59 // pred_check_branch
          %373 = sbr.rel (%p371) target = $region64
        $region63: #{tpu_custom_call.1} parent=59 // pred_region
          %p374 = scmp.lt.s32.totalorder %s26, 2
          %s375 = scalar_select %p374, %s26, 2
          %s376 = smul.addr %s375, 8
          %s377 = scalar_lea.vmem %s3, %s376
        $region64: #{tpu_custom_call.1} parent=59 // pred_fallthru
          _
      $region60: #{tpu_custom_call.1} parent=5 // pred_fallthru
        _
    $region6: #{tpu_custom_call.1} parent=1 // loop_footer
      %s19 = sadd.s32 1, %s15
    $region7: #{tpu_custom_call.1} parent=1 // loop_footer_branch
      %14 = sbr.rel target = $region3
    $region8: #{tpu_custom_call.1} parent=1 // loop_exit
      _
    %378 = vsyncpa [#allocation5], 1
    %s379 = scalar_lea.sflag [#allocation5], 1
    %380 = vsyncpa %s379, 1
    %381 = vsyncpa [#allocation7], 1
    %s382 = scalar_lea.sflag [#allocation7], 1
    %383 = vsyncpa %s382, 1

</llo_original>
